<compile_context>
chip_gen: v5e
topology: v5e:2x2
jax: 0.10.0
libtpu: 0.0.40
codegen_flags: <defaults>
</compile_context>

<pallas_src>
import jax
import jax.numpy as jnp
import numpy as np
from jax.experimental import pallas as pl
from jax.experimental.pallas import tpu as pltpu

NUM_ATTS = 4  # self.num_atts


# ---------------------------------------------------------------------------
# Helpers
# ---------------------------------------------------------------------------
def _round_up(x, m):
    return -(-x // m) * m


def _choose_batch_tiling(b):
    """Pick (tb, b_pad): big sublane-full tiles, >=2 blocks when batch allows."""
    if b <= 8:
        return b, b                       # one full-extent block, zero padding
    b_pad = _round_up(b, 16)              # so b_pad//2 stays a multiple of 8
    tb = min(512, b_pad // 2)             # >=2 parallel blocks (v7x megacore)
    if b_pad % tb:                        # only possible when b_pad > 1024
        b_pad = _round_up(b_pad, tb)
    return tb, b_pad


def _allreduce_over_atts(v, d, num_atts, op):
    """All-reduce over the atts axis of the flat [B, num_atts*d] layout.

    Positions {a*d + dd | a} are combined for every dd using XLU lane rolls
    (free slot vs. VPU/EUP). Tree reduction when num_atts is a power of two,
    linear chain otherwise.  Requires the last axis extent to be EXACTLY
    num_atts*d (unpadded) or the circular wrap would mix padding in.
    """
    assert v.shape[-1] == num_atts * d
    if num_atts & (num_atts - 1) == 0:
        shift = d
        while shift < num_atts * d:
            v = op(v, pltpu.roll(v, shift, 1))
            shift *= 2
        return v
    acc, r = v, v
    for _ in range(num_atts - 1):
        r = pltpu.roll(r, d, 1)
        acc = op(acc, r)
    return acc


# ---------------------------------------------------------------------------
# Fused kernel
# ---------------------------------------------------------------------------
def _make_fused_kernel(num_mod, num_atts, d_total):
    ad = num_atts * d_total

    def kernel(*refs):
        mod_refs = refs[:num_mod]                       # [TB, d_i] each
        w_cat_refs = refs[num_mod:2 * num_mod]          # [d_i, 2*A*D] each
        b_cat_ref = refs[2 * num_mod]                   # [1, 2*A*D]
        w_red_ref = refs[2 * num_mod + 1]               # [A*D, n_pad]
        b_red_ref = refs[2 * num_mod + 2]               # [1, n_pad]
        att_out_ref = refs[2 * num_mod + 3]             # [TB, A*D]
        red_ref = refs[2 * num_mod + 4]                 # [TB, n_pad]

        # --- ONE fused [logits | rep] matmul, accumulated over modalities -----
        # (rep columns are 0/1 selections -> exact in f32; do NOT cast to bf16.)
        fused = jnp.dot(mod_refs[0][...], w_cat_refs[0][...],
                        preferred_element_type=jnp.float32)
        for i in range(1, num_mod):
            fused = fused + jnp.dot(mod_refs[i][...], w_cat_refs[i][...],
                                    preferred_element_type=jnp.float32)
        fused = fused + b_cat_ref[...]                  # [TB, 2*A*D]

        logits = fused[:, :ad]       # att-major  [TB, A*D]  (vreg-boundary split)
        rep = fused[:, ad:]          # modality-major repeated x, exact f32
        assert logits.shape[-1] == ad and rep.shape[-1] == ad  # unpadded for rolls

        # --- softmax over the num_atts axis (full-vreg, roll-based) -----------
        m = _allreduce_over_atts(logits, d_total, num_atts, jnp.maximum)
        e = jnp.exp(logits - m)                         # EUP
        s = _allreduce_over_atts(e, d_total, num_atts, jnp.add)
        inv = pl.reciprocal(s, approx=True)             # EUP slot
        inv = inv * (2.0 - s * inv)                     # 1 Newton step -> f32 accuracy
        atts = e * inv                                  # [TB, A*D]

        att_out = atts * rep                            # gating
        att_out_ref[...] = att_out

        # --- all dim-reduce Linears as one block-diagonal matmul ---------------
        red_ref[...] = jnp.dot(att_out, w_red_ref[...],
                               preferred_element_type=jnp.float32) + b_red_ref[...]

    return kernel


def _fused_forward(mods, w_cat_list, b_cat, w_red_bd, b_red_bd,
                   num_atts, d_total, tb):
    num_mod = len(mods)
    b_pad = mods[0].shape[0]
    ad = num_atts * d_total
    two_ad = 2 * ad
    n_pad = w_red_bd.shape[1]
    grid = (b_pad // tb,)

    in_specs = (
        [pl.BlockSpec((tb, m.shape[1]), lambda i: (i, 0)) for m in mods]
        + [pl.BlockSpec((w.shape[0], two_ad), lambda i: (0, 0)) for w in w_cat_list]
        + [pl.BlockSpec((1, two_ad), lambda i: (0, 0)),        # [b_att | 0]
           pl.BlockSpec((ad, n_pad), lambda i: (0, 0)),         # block-diag w_red
           pl.BlockSpec((1, n_pad), lambda i: (0, 0))]          # concat b_red
    )

    flops = int(2 * b_pad * (d_total * two_ad + ad * n_pad))
    transcendentals = int(b_pad * ad)
    bytes_accessed = int(4 * (b_pad * d_total + d_total * two_ad + two_ad
                              + ad * n_pad + n_pad
                              + b_pad * ad + b_pad * n_pad))

    return pl.pallas_call(
        _make_fused_kernel(num_mod, num_atts, d_total),
        out_shape=(jax.ShapeDtypeStruct((b_pad, ad), jnp.float32),
                   jax.ShapeDtypeStruct((b_pad, n_pad), jnp.float32)),
        grid=grid,
        in_specs=in_specs,
        out_specs=(
            pl.BlockSpec((tb, ad), lambda i: (i, 0)),           # att_out (lane-dense)
            pl.BlockSpec((tb, n_pad), lambda i: (i, 0)),        # reduced (lane-dense)
        ),
        compiler_params=pltpu.CompilerParams(
            dimension_semantics=("parallel",)),                 # v7x: 2 TCs split batch
        cost_estimate=pl.CostEstimate(flops=flops,
                                      transcendentals=transcendentals,
                                      bytes_accessed=bytes_accessed),
    )(*mods, *w_cat_list, b_cat, w_red_bd, b_red_bd)


# ---------------------------------------------------------------------------
# One-time parameter preparation (done OUTSIDE the per-timestep forward)
# ---------------------------------------------------------------------------
def prepare_fused_params(params, mod_dims, num_atts, reduced_dim, lane_pad=128):
    mod_dims = tuple(int(d) for d in mod_dims)
    d_total = sum(mod_dims)
    ad = num_atts * d_total

    w_att = np.asarray(params["w_att"], dtype=np.float32)          # [D, A*D]
    b_att = np.asarray(params["b_att"], dtype=np.float32).reshape(1, ad)

    # Per-modality fused weight slice: [d_i, 2*A*D] = [ w_att rows | rep selection ]
    # rep layout is modality-major: modality i occupies columns
    # [off_i, off_i + num_atts*d_i), each repeat being an identity copy of m_i.
    w_cat_list = []
    row0, off = 0, 0
    for d in mod_dims:
        w_i = np.zeros((d, 2 * ad), dtype=np.float32)
        w_i[:, :ad] = w_att[row0:row0 + d, :]
        for a in range(num_atts):
            c = ad + off + a * d
            w_i[np.arange(d), c + np.arange(d)] = 1.0
        w_cat_list.append(jnp.asarray(w_i))
        row0 += d
        off += num_atts * d

    b_cat = np.zeros((1, 2 * ad), dtype=np.float32)
    b_cat[:, :ad] = b_att

    # Block-diagonal dim-reduce weight, output lanes zero-padded to a 128 multiple.
    n_out = len(mod_dims) * reduced_dim
    n_pad = _round_up(n_out, lane_pad)
    w_bd = np.zeros((ad, n_pad), dtype=np.float32)
    b_bd = np.zeros((1, n_pad), dtype=np.float32)
    r0, c0 = 0, 0
    for i, d in enumerate(mod_dims):
        w = np.asarray(params["w_red"][i], dtype=np.float32)
        b = np.asarray(params["b_red"][i], dtype=np.float32)
        w_bd[r0:r0 + d * num_atts, c0:c0 + reduced_dim] = w
        b_bd[0, c0:c0 + reduced_dim] = b[0]
        r0 += d * num_atts
        c0 += reduced_dim

    # TODO(synk): for large D on v6e/v7x, also keep bf16 copies of the w_att /
    # w_red_bd halves (NOT the rep selection half, which must stay f32-exact).
    return {
        "w_cat": w_cat_list,
        "b_cat": jnp.asarray(b_cat),
        "w_red_bd": jnp.asarray(w_bd),
        "b_red_bd": jnp.asarray(b_bd),
        "mod_dims": mod_dims,
        "num_atts": int(num_atts),
        "reduced_dim": int(reduced_dim),
        "n_out": int(n_out),
    }


# ---------------------------------------------------------------------------
# MultipleAttentionFusion.fusion
# ---------------------------------------------------------------------------
def multiple_attention_fusion(in_modalities, fused):
    mod_dims = fused["mod_dims"]
    num_atts = fused["num_atts"]
    reduced_dim = fused["reduced_dim"]
    assert tuple(m.shape[1] for m in in_modalities) == mod_dims, \
        "modality dims do not match prepared parameters"
    d_total = sum(mod_dims)

    b = in_modalities[0].shape[0]
    tb, b_pad = _choose_batch_tiling(b)

    mods = [m.astype(jnp.float32) for m in in_modalities]
    if b_pad != b:                                   # only when B > 8 and ragged
        mods = [jnp.pad(m, ((0, b_pad - b), (0, 0))) for m in mods]

    att_out_p, red_p = _fused_forward(
        mods, fused["w_cat"], fused["b_cat"],
        fused["w_red_bd"], fused["b_red_bd"], num_atts, d_total, tb)

    att_out = att_out_p[:b]                          # [B, A*D]
    red = red_p[:b, :fused["n_out"]]                 # [B, num_mod*reduced_dim]

    # API-compatible per-modality splits. Inside an LSTHM timestep loop, callers
    # can consume the fused att_out / red slabs directly and skip these slices.
    out_modalities, start = [], 0
    for d in mod_dims:
        out_modalities.append(att_out[:, start:start + d * num_atts])
        start += d * num_atts
    dim_reduced = [red[:, i * reduced_dim:(i + 1) * reduced_dim]
                   for i in range(len(mod_dims))]
    return dim_reduced, out_modalities


# ---------------------------------------------------------------------------
# Pure-JAX reference (mirrors the PyTorch semantics exactly)
# ---------------------------------------------------------------------------
def reference(in_modalities, params, num_atts=NUM_ATTS):
    hi = jax.lax.Precision.HIGHEST
    num_modalities = len(in_modalities)
    in_tensor = jnp.concatenate(in_modalities, axis=1)
    b, d = in_tensor.shape
    logits = jnp.dot(in_tensor, params["w_att"], precision=hi) + params["b_att"][0]
    atts = jax.nn.softmax(logits.reshape(b, num_atts, d), axis=1).reshape(b, num_atts * d)
    rep = jnp.concatenate([jnp.tile(m, (1, num_atts)) for m in in_modalities], axis=1)
    att_out = atts * rep
    out_modalities, start = [], 0
    for i in range(num_modalities):
        mlen = in_modalities[i].shape[1] * num_atts
        out_modalities.append(att_out[:, start:start + mlen])
        start += mlen
    dim_reduced = [
        jnp.dot(out_modalities[i], params["w_red"][i], precision=hi) + params["b_red"][i][0]
        for i in range(num_modalities)
    ]
    return dim_reduced, out_modalities


# ---------------------------------------------------------------------------
if __name__ == "__main__":
    key = jax.random.PRNGKey(0)
    B = 2
    mod_dims = [8, 16, 8]          # three modalities, D = 32, A*D = 128
    D = sum(mod_dims)
    reduced_dim = 16

    keys = jax.random.split(key, 3 + 2 * len(mod_dims))
    in_modalities = [
        jax.random.normal(keys[i], (B, d), dtype=jnp.float32)
        for i, d in enumerate(mod_dims)
    ]

    # deterministic parameter init
    w_att = 0.1 * jax.random.normal(keys[3], (D, NUM_ATTS * D), dtype=jnp.float32)
    b_att = 0.1 * jax.random.normal(keys[4], (1, NUM_ATTS * D), dtype=jnp.float32)
    w_red, b_red = [], []
    for i, d in enumerate(mod_dims):
        w_red.append(0.1 * jax.random.normal(keys[5 + i], (d * NUM_ATTS, reduced_dim),
                                             dtype=jnp.float32))
        b_red.append(jnp.zeros((1, reduced_dim), dtype=jnp.float32))
    params = {"w_att": w_att, "b_att": b_att, "w_red": w_red, "b_red": b_red}

    fused = prepare_fused_params(params, mod_dims, NUM_ATTS, reduced_dim)

    dim_reduced, out_modalities = multiple_attention_fusion(in_modalities, fused)
    jax.block_until_ready(dim_reduced)
    jax.block_until_ready(out_modalities)

    ref_dr, ref_om = reference(in_modalities, params)
    for a, b in zip(dim_reduced, ref_dr):
        np.testing.assert_allclose(np.asarray(a), np.asarray(b), rtol=3e-5, atol=3e-5)
    for a, b in zip(out_modalities, ref_om):
        np.testing.assert_allclose(np.asarray(a), np.asarray(b), rtol=3e-5, atol=3e-5)

    print("KERNEL_OK")
</pallas_src>

<mosaic_0001>
module attributes {stable_mosaic.version = 11 : i64} {
  func.func @kernel(%arg0: i32, %arg1: memref<2x8xf32, #tpu.memory_space<vmem>>, %arg2: memref<2x16xf32, #tpu.memory_space<vmem>>, %arg3: memref<2x8xf32, #tpu.memory_space<vmem>>, %arg4: memref<8x256xf32, #tpu.memory_space<vmem>>, %arg5: memref<16x256xf32, #tpu.memory_space<vmem>>, %arg6: memref<8x256xf32, #tpu.memory_space<vmem>>, %arg7: memref<1x256xf32, #tpu.memory_space<vmem>>, %arg8: memref<128x128xf32, #tpu.memory_space<vmem>>, %arg9: memref<1x128xf32, #tpu.memory_space<vmem>>, %arg10: memref<2x128xf32, #tpu.memory_space<vmem>>, %arg11: memref<2x128xf32, #tpu.memory_space<vmem>>) attributes {dimension_semantics = [#tpu.dimension_semantics<parallel>], iteration_bounds = array<i64: 1>, scalar_prefetch = 0 : i64, scratch_operands = 0 : i64, tpu.core_type = #tpu.core_type<tc>, window_params = [{transform_indices = @transform_0, window_bounds = array<i64: 2, 8>}, {transform_indices = @transform_1, window_bounds = array<i64: 2, 16>}, {transform_indices = @transform_2, window_bounds = array<i64: 2, 8>}, {pipeline_mode = #tpu.pipeline_mode<synchronous>, transform_indices = @transform_3, window_bounds = array<i64: 8, 256>}, {pipeline_mode = #tpu.pipeline_mode<synchronous>, transform_indices = @transform_4, window_bounds = array<i64: 16, 256>}, {pipeline_mode = #tpu.pipeline_mode<synchronous>, transform_indices = @transform_5, window_bounds = array<i64: 8, 256>}, {pipeline_mode = #tpu.pipeline_mode<synchronous>, transform_indices = @transform_6, window_bounds = array<i64: 1, 256>}, {pipeline_mode = #tpu.pipeline_mode<synchronous>, transform_indices = @transform_7, window_bounds = array<i64: 128, 128>}, {pipeline_mode = #tpu.pipeline_mode<synchronous>, transform_indices = @transform_8, window_bounds = array<i64: 1, 128>}, {transform_indices = @transform_9, window_bounds = array<i64: 2, 128>}, {transform_indices = @transform_10, window_bounds = array<i64: 2, 128>}]} {
    %c0 = arith.constant 0 : index
    %c0_0 = arith.constant 0 : index
    %0 = vector.load %arg1[%c0, %c0_0] : memref<2x8xf32, #tpu.memory_space<vmem>>, vector<2x8xf32>
    %c0_1 = arith.constant 0 : index
    %c0_2 = arith.constant 0 : index
    %1 = vector.load %arg4[%c0_1, %c0_2] : memref<8x256xf32, #tpu.memory_space<vmem>>, vector<8x256xf32>
    %cst = arith.constant dense<0.000000e+00> : vector<2x256xf32>
    %2 = tpu.matmul %0, %1, %cst {dimension_numbers = #tpu.dot_dimension_numbers<[1], [0], [0], [1], [0, 0, 1, 1], [], []>} : vector<2x8xf32>, vector<8x256xf32>, vector<2x256xf32> -> vector<2x256xf32>
    %c0_3 = arith.constant 0 : index
    %c0_4 = arith.constant 0 : index
    %3 = vector.load %arg2[%c0_3, %c0_4] : memref<2x16xf32, #tpu.memory_space<vmem>>, vector<2x16xf32>
    %c0_5 = arith.constant 0 : index
    %c0_6 = arith.constant 0 : index
    %4 = vector.load %arg5[%c0_5, %c0_6] : memref<16x256xf32, #tpu.memory_space<vmem>>, vector<16x256xf32>
    %cst_7 = arith.constant dense<0.000000e+00> : vector<2x256xf32>
    %5 = tpu.matmul %3, %4, %cst_7 {dimension_numbers = #tpu.dot_dimension_numbers<[1], [0], [0], [1], [0, 0, 1, 1], [], []>} : vector<2x16xf32>, vector<16x256xf32>, vector<2x256xf32> -> vector<2x256xf32>
    %6 = arith.addf %2, %5 : vector<2x256xf32>
    %c0_8 = arith.constant 0 : index
    %c0_9 = arith.constant 0 : index
    %7 = vector.load %arg3[%c0_8, %c0_9] : memref<2x8xf32, #tpu.memory_space<vmem>>, vector<2x8xf32>
    %c0_10 = arith.constant 0 : index
    %c0_11 = arith.constant 0 : index
    %8 = vector.load %arg6[%c0_10, %c0_11] : memref<8x256xf32, #tpu.memory_space<vmem>>, vector<8x256xf32>
    %cst_12 = arith.constant dense<0.000000e+00> : vector<2x256xf32>
    %9 = tpu.matmul %7, %8, %cst_12 {dimension_numbers = #tpu.dot_dimension_numbers<[1], [0], [0], [1], [0, 0, 1, 1], [], []>} : vector<2x8xf32>, vector<8x256xf32>, vector<2x256xf32> -> vector<2x256xf32>
    %10 = arith.addf %6, %9 : vector<2x256xf32>
    %c0_13 = arith.constant 0 : index
    %c0_14 = arith.constant 0 : index
    %11 = vector.load %arg7[%c0_13, %c0_14] : memref<1x256xf32, #tpu.memory_space<vmem>>, vector<1x256xf32>
    %12 = vector.broadcast %11 : vector<1x256xf32> to vector<2x256xf32>
    %13 = arith.addf %10, %12 : vector<2x256xf32>
    %14 = vector.extract_strided_slice %13 {offsets = [0, 0], sizes = [2, 128], strides = [1, 1]} : vector<2x256xf32> to vector<2x128xf32>
    %15 = vector.extract_strided_slice %13 {offsets = [0, 128], sizes = [2, 128], strides = [1, 1]} : vector<2x256xf32> to vector<2x128xf32>
    %c32_i32 = arith.constant 32 : i32
    %16 = tpu.dynamic_rotate %14 by %c32_i32 dim 1 : vector<2x128xf32>, i32 -> vector<2x128xf32>
    %17 = arith.maximumf %14, %16 : vector<2x128xf32>
    %c64_i32 = arith.constant 64 : i32
    %18 = tpu.dynamic_rotate %17 by %c64_i32 dim 1 : vector<2x128xf32>, i32 -> vector<2x128xf32>
    %19 = arith.maximumf %17, %18 : vector<2x128xf32>
    %20 = arith.subf %14, %19 : vector<2x128xf32>
    %21 = math.exp %20 : vector<2x128xf32>
    %c32_i32_15 = arith.constant 32 : i32
    %22 = tpu.dynamic_rotate %21 by %c32_i32_15 dim 1 : vector<2x128xf32>, i32 -> vector<2x128xf32>
    %23 = arith.addf %21, %22 : vector<2x128xf32>
    %c64_i32_16 = arith.constant 64 : i32
    %24 = tpu.dynamic_rotate %23 by %c64_i32_16 dim 1 : vector<2x128xf32>, i32 -> vector<2x128xf32>
    %25 = arith.addf %23, %24 : vector<2x128xf32>
    %26 = tpu.reciprocal %25 {approx = true} : vector<2x128xf32> -> vector<2x128xf32>
    %27 = arith.mulf %25, %26 : vector<2x128xf32>
    %cst_17 = arith.constant 2.000000e+00 : f32
    %28 = vector.broadcast %cst_17 : f32 to vector<2x128xf32>
    %29 = arith.subf %28, %27 : vector<2x128xf32>
    %30 = arith.mulf %26, %29 : vector<2x128xf32>
    %31 = arith.mulf %21, %30 : vector<2x128xf32>
    %32 = arith.mulf %31, %15 : vector<2x128xf32>
    %c0_18 = arith.constant 0 : index
    %c0_19 = arith.constant 0 : index
    %33 = vector.load %arg10[%c0_18, %c0_19] : memref<2x128xf32, #tpu.memory_space<vmem>>, vector<2x128xf32>
    tpu.vector_store %arg10[%c0_18, %c0_19], %32 {strides = array<i32>} : memref<2x128xf32, #tpu.memory_space<vmem>>, vector<2x128xf32>,
    %c0_20 = arith.constant 0 : index
    %c0_21 = arith.constant 0 : index
    %34 = vector.load %arg8[%c0_20, %c0_21] : memref<128x128xf32, #tpu.memory_space<vmem>>, vector<128x128xf32>
    %cst_22 = arith.constant dense<0.000000e+00> : vector<2x128xf32>
    %35 = tpu.matmul %32, %34, %cst_22 {dimension_numbers = #tpu.dot_dimension_numbers<[1], [0], [0], [1], [0, 0, 1, 1], [], []>} : vector<2x128xf32>, vector<128x128xf32>, vector<2x128xf32> -> vector<2x128xf32>
    %c0_23 = arith.constant 0 : index
    %c0_24 = arith.constant 0 : index
    %36 = vector.load %arg9[%c0_23, %c0_24] : memref<1x128xf32, #tpu.memory_space<vmem>>, vector<1x128xf32>
    %37 = vector.broadcast %36 : vector<1x128xf32> to vector<2x128xf32>
    %38 = arith.addf %35, %37 : vector<2x128xf32>
    %c0_25 = arith.constant 0 : index
    %c0_26 = arith.constant 0 : index
    %39 = vector.load %arg11[%c0_25, %c0_26] : memref<2x128xf32, #tpu.memory_space<vmem>>, vector<2x128xf32>
    tpu.vector_store %arg11[%c0_25, %c0_26], %38 {strides = array<i32>} : memref<2x128xf32, #tpu.memory_space<vmem>>, vector<2x128xf32>,
    return
  }
  func.func @transform_0(%arg0: i32) -> (i32, i32) {
    %c0_i32 = arith.constant 0 : i32
    %c0_i32_0 = arith.constant 0 : i32
    return %arg0, %c0_i32 : i32, i32
  }
  func.func @transform_1(%arg0: i32) -> (i32, i32) {
    %c0_i32 = arith.constant 0 : i32
    %c0_i32_0 = arith.constant 0 : i32
    return %arg0, %c0_i32 : i32, i32
  }
  func.func @transform_2(%arg0: i32) -> (i32, i32) {
    %c0_i32 = arith.constant 0 : i32
    %c0_i32_0 = arith.constant 0 : i32
    return %arg0, %c0_i32 : i32, i32
  }
  func.func @transform_3(%arg0: i32) -> (i32, i32) {
    %c0_i32 = arith.constant 0 : i32
    %c0_i32_0 = arith.constant 0 : i32
    %c0_i32_1 = arith.constant 0 : i32
    return %c0_i32, %c0_i32_0 : i32, i32
  }
  func.func @transform_4(%arg0: i32) -> (i32, i32) {
    %c0_i32 = arith.constant 0 : i32
    %c0_i32_0 = arith.constant 0 : i32
    %c0_i32_1 = arith.constant 0 : i32
    return %c0_i32, %c0_i32_0 : i32, i32
  }
  func.func @transform_5(%arg0: i32) -> (i32, i32) {
    %c0_i32 = arith.constant 0 : i32
    %c0_i32_0 = arith.constant 0 : i32
    %c0_i32_1 = arith.constant 0 : i32
    return %c0_i32, %c0_i32_0 : i32, i32
  }
  func.func @transform_6(%arg0: i32) -> (i32, i32) {
    %c0_i32 = arith.constant 0 : i32
    %c0_i32_0 = arith.constant 0 : i32
    %c0_i32_1 = arith.constant 0 : i32
    return %c0_i32, %c0_i32_0 : i32, i32
  }
  func.func @transform_7(%arg0: i32) -> (i32, i32) {
    %c0_i32 = arith.constant 0 : i32
    %c0_i32_0 = arith.constant 0 : i32
    %c0_i32_1 = arith.constant 0 : i32
    return %c0_i32, %c0_i32_0 : i32, i32
  }
  func.func @transform_8(%arg0: i32) -> (i32, i32) {
    %c0_i32 = arith.constant 0 : i32
    %c0_i32_0 = arith.constant 0 : i32
    %c0_i32_1 = arith.constant 0 : i32
    return %c0_i32, %c0_i32_0 : i32, i32
  }
  func.func @transform_9(%arg0: i32) -> (i32, i32) {
    %c0_i32 = arith.constant 0 : i32
    %c0_i32_0 = arith.constant 0 : i32
    return %arg0, %c0_i32 : i32, i32
  }
  func.func @transform_10(%arg0: i32) -> (i32, i32) {
    %c0_i32 = arith.constant 0 : i32
    %c0_i32_0 = arith.constant 0 : i32
    return %arg0, %c0_i32 : i32, i32
  }
}

</mosaic_0001>

<llo_original>
// kernel: tpu_custom_call.1
$region0: #{tpu_custom_call.1}
  #allocation0 [shape = 'u32[]', space=smem, size = 0x4, offset = 0x4, fixed_abs, tag = 'smem constant byte address 0x4 - core index']
  #allocation1 [shape = 'u32[72,128]{1,0:T(1,128)}', space=vmem, size = 0x9000, scoped, tag = 'internal scratch']
  %s0 = inlined_call_operand.hbm [shape: f32[2,8], index: 0, kind: input, shape index: {}]
  %s1 = inlined_call_operand.hbm [shape: f32[2,16], index: 1, kind: input, shape index: {}]
  %s2 = inlined_call_operand.hbm [shape: f32[2,8], index: 2, kind: input, shape index: {}]
  %s3 = inlined_call_operand.hbm [shape: f32[8,256], index: 3, kind: input, shape index: {}]
  %s4 = inlined_call_operand.hbm [shape: f32[16,256], index: 4, kind: input, shape index: {}]
  %s5 = inlined_call_operand.hbm [shape: f32[8,256], index: 5, kind: input, shape index: {}]
  %s6 = inlined_call_operand.vmem [shape: f32[1,256], index: 6, kind: input, shape index: {}]
  %s7 = inlined_call_operand.hbm [shape: f32[128,128], index: 7, kind: input, shape index: {}]
  %s8 = inlined_call_operand.vmem [shape: f32[1,128], index: 8, kind: input, shape index: {}]
  %s9 = inlined_call_operand.hbm [shape: f32[2,128], index: 9, kind: output, shape index: {0}]
  %s10 = inlined_call_operand.hbm [shape: f32[2,128], index: 10, kind: output, shape index: {1}]
  %11 = xla_tuple %s9, %s10
  %s12 = sld [smem:[#allocation0]]
  $region82: #{tpu_custom_call.1} parent=0
    _
  %s14 = ssub.s32 1, %s12
  %s15 = scalar_select 0, %s14, %s12
  $region1: #{tpu_custom_call.1} parent=0
    #allocation2 [shape = 'u8[1024]{0}', space=vmem, size = 0x400, scoped, tag = 'input window, operand 0, single buffered']
    #allocation3 [shape = 's32[1]{0}', space=sflag, size = 0x4, scoped, tag = 'scoped memory for tpu_custom_call.1']
    #allocation4 [shape = 's32[1]{0}', space=sflag, size = 0x4, scoped, tag = 'scoped memory for tpu_custom_call.1']
    #allocation5 [shape = 'u8[1024]{0}', space=vmem, size = 0x400, scoped, tag = 'input window, operand 1, single buffered']
    #allocation6 [shape = 's32[1]{0}', space=sflag, size = 0x4, scoped, tag = 'scoped memory for tpu_custom_call.1']
    #allocation7 [shape = 'u8[1024]{0}', space=vmem, size = 0x400, scoped, tag = 'input window, operand 2, single buffered']
    #allocation8 [shape = 'u8[8192]{0}', space=vmem, size = 0x2000, scoped, tag = 'input window, operand 3, single buffered']
    #allocation9 [shape = 's32[1]{0}', space=sflag, size = 0x4, scoped, tag = 'scoped memory for tpu_custom_call.1']
    #allocation10 [shape = 'u8[16384]{0}', space=vmem, size = 0x4000, scoped, tag = 'input window, operand 4, single buffered']
    #allocation11 [shape = 'u8[8192]{0}', space=vmem, size = 0x2000, scoped, tag = 'input window, operand 5, single buffered']
    #allocation12 [shape = 's32[1]{0}', space=sflag, size = 0x4, scoped, tag = 'scoped memory for tpu_custom_call.1']
    #allocation13 [shape = 'u8[65536]{0}', space=vmem, size = 0x10000, scoped, tag = 'input window, operand 7, single buffered']
    #allocation14 [shape = 'u8[1024]{0}', space=vmem, size = 0x400, scoped, tag = 'output window, operand 0, single buffered']
    #allocation15 [shape = 'u8[1024]{0}', space=vmem, size = 0x400, scoped, tag = 'output window, operand 1, single buffered']
    #allocation16 [shape = 's32[1]{0}', space=sflag, size = 0x4, scoped, tag = 'scoped memory for tpu_custom_call.1']
    %16 = vsyncpa [#allocation3], 0
    %17 = vsyncpa [#allocation6], 0
    %18 = vsyncpa [#allocation9], 0
    %19 = vsyncpa [#allocation12], 0
    %20 = vsyncpa [#allocation4], 0
    %21 = vsyncpa [#allocation16], 0
    // Predicated region
    $region2: #{tpu_custom_call.1} parent=1 // pred_check
      _
    $region3: #{tpu_custom_call.1} parent=1 // pred_check_branch
      %23 = sbr.rel (0) target = $region5
    $region4: #{tpu_custom_call.1} parent=1 // pred_region
      %25 = vsyncadd [#allocation3], 0
      %s27 = sshll.u32 %s0, 4
      %s28 = int_to_ptr.hbm [resolvable:$true] %s27
      %s29 = sshll.u32 [#allocation2], 4
      %s30 = int_to_ptr.vmem [resolvable:$true] %s29
      %32 = dma.hbm_to_vmem [thread:$0]  %s28, 32, %s30, [#allocation3]
    $region5: #{tpu_custom_call.1} parent=1 // pred_fallthru
      _
    // Predicated region
    $region6: #{tpu_custom_call.1} parent=1 // pred_check
      _
    $region7: #{tpu_custom_call.1} parent=1 // pred_check_branch
      %34 = sbr.rel (0) target = $region9
    $region8: #{tpu_custom_call.1} parent=1 // pred_region
      %36 = vsyncadd [#allocation6], 0
      %s38 = sshll.u32 %s1, 4
      %s39 = int_to_ptr.hbm [resolvable:$true] %s38
      %s40 = sshll.u32 [#allocation5], 4
      %s41 = int_to_ptr.vmem [resolvable:$true] %s40
      %43 = dma.hbm_to_vmem [thread:$0]  %s39, 32, %s41, [#allocation6]
    $region9: #{tpu_custom_call.1} parent=1 // pred_fallthru
      _
    // Predicated region
    $region10: #{tpu_custom_call.1} parent=1 // pred_check
      _
    $region11: #{tpu_custom_call.1} parent=1 // pred_check_branch
      %45 = sbr.rel (0) target = $region13
    $region12: #{tpu_custom_call.1} parent=1 // pred_region
      %47 = vsyncadd [#allocation6], 0
      %s49 = sshll.u32 %s2, 4
      %s50 = int_to_ptr.hbm [resolvable:$true] %s49
      %s51 = sshll.u32 [#allocation7], 4
      %s52 = int_to_ptr.vmem [resolvable:$true] %s51
      %54 = dma.hbm_to_vmem [thread:$0]  %s50, 32, %s52, [#allocation6]
    $region13: #{tpu_custom_call.1} parent=1 // pred_fallthru
      _
    // Predicated region
    $region14: #{tpu_custom_call.1} parent=1 // pred_check
      _
    $region15: #{tpu_custom_call.1} parent=1 // pred_check_branch
      %56 = sbr.rel (0) target = $region17
    $region16: #{tpu_custom_call.1} parent=1 // pred_region
      %58 = vsyncadd [#allocation9], 0
      %s60 = sshll.u32 %s3, 4
      %s61 = int_to_ptr.hbm [resolvable:$true] %s60
      %s62 = sshll.u32 [#allocation8], 4
      %s63 = int_to_ptr.vmem [resolvable:$true] %s62
      %65 = dma.hbm_to_vmem [thread:$0]  %s61, 256, %s63, [#allocation9]
    $region17: #{tpu_custom_call.1} parent=1 // pred_fallthru
      _
    // Predicated region
    $region18: #{tpu_custom_call.1} parent=1 // pred_check
      _
    $region19: #{tpu_custom_call.1} parent=1 // pred_check_branch
      %67 = sbr.rel (0) target = $region21
    $region20: #{tpu_custom_call.1} parent=1 // pred_region
      %69 = vsyncadd [#allocation9], 0
      %s70 = sshll.u32 %s4, 4
      %s71 = int_to_ptr.hbm [resolvable:$true] %s70
      %s72 = sshll.u32 [#allocation10], 4
      %s73 = int_to_ptr.vmem [resolvable:$true] %s72
      %78 = dma.hbm_to_vmem [thread:$0]  %s71, 512, %s73, [#allocation9], 256, 256, 16
    $region21: #{tpu_custom_call.1} parent=1 // pred_fallthru
      _
    // Predicated region
    $region22: #{tpu_custom_call.1} parent=1 // pred_check
      _
    $region23: #{tpu_custom_call.1} parent=1 // pred_check_branch
      %80 = sbr.rel (0) target = $region25
    $region24: #{tpu_custom_call.1} parent=1 // pred_region
      %82 = vsyncadd [#allocation12], 0
      %s84 = sshll.u32 %s5, 4
      %s85 = int_to_ptr.hbm [resolvable:$true] %s84
      %s86 = sshll.u32 [#allocation11], 4
      %s87 = int_to_ptr.vmem [resolvable:$true] %s86
      %89 = dma.hbm_to_vmem [thread:$0]  %s85, 256, %s87, [#allocation12]
    $region25: #{tpu_custom_call.1} parent=1 // pred_fallthru
      _
    // Predicated region
    $region26: #{tpu_custom_call.1} parent=1 // pred_check
      _
    $region27: #{tpu_custom_call.1} parent=1 // pred_check_branch
      %91 = sbr.rel (0) target = $region29
    $region28: #{tpu_custom_call.1} parent=1 // pred_region
      _
    $region29: #{tpu_custom_call.1} parent=1 // pred_fallthru
      _
    // Predicated region
    $region30: #{tpu_custom_call.1} parent=1 // pred_check
      _
    $region31: #{tpu_custom_call.1} parent=1 // pred_check_branch
      %93 = sbr.rel (0) target = $region33
    $region32: #{tpu_custom_call.1} parent=1 // pred_region
      %95 = vsyncadd [#allocation12], 0
      %s96 = sshll.u32 %s7, 4
      %s97 = int_to_ptr.hbm [resolvable:$true] %s96
      %s98 = sshll.u32 [#allocation13], 4
      %s99 = int_to_ptr.vmem [resolvable:$true] %s98
      %104 = dma.hbm_to_vmem [thread:$0]  %s97, 2048, %s99, [#allocation12], 128, 128, 8
    $region33: #{tpu_custom_call.1} parent=1 // pred_fallthru
      _
    // Predicated region
    $region34: #{tpu_custom_call.1} parent=1 // pred_check
      _
    $region35: #{tpu_custom_call.1} parent=1 // pred_check_branch
      %106 = sbr.rel (0) target = $region37
    $region36: #{tpu_custom_call.1} parent=1 // pred_region
      _
    $region37: #{tpu_custom_call.1} parent=1 // pred_fallthru
      _
    // Predicated region
    $region38: #{tpu_custom_call.1} parent=1 // pred_check
      _
    $region39: #{tpu_custom_call.1} parent=1 // pred_check_branch
      %108 = sbr.rel (0) target = $region41
    $region40: #{tpu_custom_call.1} parent=1 // pred_region
      %110 = dma.done [#allocation3], 32
    $region41: #{tpu_custom_call.1} parent=1 // pred_fallthru
      _
    // Predicated region
    $region42: #{tpu_custom_call.1} parent=1 // pred_check
      _
    $region43: #{tpu_custom_call.1} parent=1 // pred_check_branch
      %112 = sbr.rel (0) target = $region45
    $region44: #{tpu_custom_call.1} parent=1 // pred_region
      %114 = dma.done [#allocation6], 32
    $region45: #{tpu_custom_call.1} parent=1 // pred_fallthru
      _
    // Predicated region
    $region46: #{tpu_custom_call.1} parent=1 // pred_check
      _
    $region47: #{tpu_custom_call.1} parent=1 // pred_check_branch
      %116 = sbr.rel (0) target = $region49
    $region48: #{tpu_custom_call.1} parent=1 // pred_region
      %118 = dma.done [#allocation6], 32
    $region49: #{tpu_custom_call.1} parent=1 // pred_fallthru
      _
    // Predicated region
    $region50: #{tpu_custom_call.1} parent=1 // pred_check
      _
    $region51: #{tpu_custom_call.1} parent=1 // pred_check_branch
      %120 = sbr.rel (0) target = $region53
    $region52: #{tpu_custom_call.1} parent=1 // pred_region
      %122 = dma.done [#allocation9], 256
    $region53: #{tpu_custom_call.1} parent=1 // pred_fallthru
      _
    // Predicated region
    $region54: #{tpu_custom_call.1} parent=1 // pred_check
      _
    $region55: #{tpu_custom_call.1} parent=1 // pred_check_branch
      %124 = sbr.rel (0) target = $region57
    $region56: #{tpu_custom_call.1} parent=1 // pred_region
      %126 = dma.done [#allocation9], 512
    $region57: #{tpu_custom_call.1} parent=1 // pred_fallthru
      _
    // Predicated region
    $region58: #{tpu_custom_call.1} parent=1 // pred_check
      _
    $region59: #{tpu_custom_call.1} parent=1 // pred_check_branch
      %128 = sbr.rel (0) target = $region61
    $region60: #{tpu_custom_call.1} parent=1 // pred_region
      %130 = dma.done [#allocation12], 256
    $region61: #{tpu_custom_call.1} parent=1 // pred_fallthru
      _
    // Predicated region
    $region62: #{tpu_custom_call.1} parent=1 // pred_check
      _
    $region63: #{tpu_custom_call.1} parent=1 // pred_check_branch
      %132 = sbr.rel (0) target = $region65
    $region64: #{tpu_custom_call.1} parent=1 // pred_region
      %134 = dma.done [#allocation12], 2048
    $region65: #{tpu_custom_call.1} parent=1 // pred_fallthru
      _
    %v135 = vld [vmem:[#allocation2] sm:$0x3]
    %v136 = vld [vmem:[#allocation8] sm:$0xff]
    %v137 = vld [vmem:[#allocation8 + $0x8] sm:$0xff]
    %v138 = vld [vmem:[#allocation5] sm:$0x3]
    %v139 = vld [vmem:[#allocation10] sm:$0xff]
    %v140 = vld [vmem:[#allocation10 + $0x8] sm:$0xff]
    %v141 = vld [vmem:[#allocation10 + $0x10] sm:$0xff]
    %v142 = vld [vmem:[#allocation10 + $0x18] sm:$0xff]
    %vm143 = vcmask 130048
    %v145 = vsel %vm143, %v138, 0
    %147 = vmatpush.msra.mxu0 0.0
    %148 = vmatpush.msra.mxu0 0.0
    %149 = vmatpush.msra.mxu0 0.0
    %150 = vmatpush.msra.mxu0 0.0
    %151 = vmatpush.msra.mxu0 0.0
    %152 = vmatpush.msra.mxu0 0.0
    %153 = vmatpush.msra.mxu0 0.0
    %154 = vmatpush.msra.mxu0 0.0
    %155 = vmatpush.msra.mxu0 0.0
    %156 = vmatpush.msra.mxu0 0.0
    %157 = vmatpush.msra.mxu0 0.0
    %158 = vmatpush.msra.mxu0 0.0
    %159 = vmatpush.msra.mxu0 0.0
    %160 = vmatpush.msra.mxu0 0.0
    %161 = vmatpush.msra.mxu0 %v141
    %162 = vmatpush.msra.mxu0 %v139
    %163 = vmatmul.f32.gmra.mxu0 %v145
    %v164 = vpop.f32.mrf.mxu0
    %v165 = vadd.f32 0.0, %v164
    %166 = vdwg.mxu0
    %167 = vmatpush.msra.mxu0 0.0
    %168 = vmatpush.msra.mxu0 0.0
    %169 = vmatpush.msra.mxu0 0.0
    %170 = vmatpush.msra.mxu0 0.0
    %171 = vmatpush.msra.mxu0 0.0
    %172 = vmatpush.msra.mxu0 0.0
    %173 = vmatpush.msra.mxu0 0.0
    %174 = vmatpush.msra.mxu0 0.0
    %175 = vmatpush.msra.mxu0 0.0
    %176 = vmatpush.msra.mxu0 0.0
    %177 = vmatpush.msra.mxu0 0.0
    %178 = vmatpush.msra.mxu0 0.0
    %179 = vmatpush.msra.mxu0 0.0
    %180 = vmatpush.msra.mxu0 0.0
    %181 = vmatpush.msra.mxu0 %v142
    %182 = vmatpush.msra.mxu0 %v140
    %183 = vmatmul.f32.gmra.mxu0 %v145
    %v184 = vpop.f32.mrf.mxu0
    %v185 = vadd.f32 0.0, %v184
    %186 = vdwg.mxu0
    %vm187 = vcmask 64512
    %v189 = vsel %vm187, %v135, 0
    %191 = vmatpush.msra.mxu0 0.0
    %192 = vmatpush.msra.mxu0 0.0
    %193 = vmatpush.msra.mxu0 0.0
    %194 = vmatpush.msra.mxu0 0.0
    %195 = vmatpush.msra.mxu0 0.0
    %196 = vmatpush.msra.mxu0 0.0
    %197 = vmatpush.msra.mxu0 0.0
    %198 = vmatpush.msra.mxu0 0.0
    %199 = vmatpush.msra.mxu0 0.0
    %200 = vmatpush.msra.mxu0 0.0
    %201 = vmatpush.msra.mxu0 0.0
    %202 = vmatpush.msra.mxu0 0.0
    %203 = vmatpush.msra.mxu0 0.0
    %204 = vmatpush.msra.mxu0 0.0
    %205 = vmatpush.msra.mxu0 0.0
    %206 = vmatpush.msra.mxu0 %v136
    %207 = vmatmul.f32.gmra.mxu0 %v189
    %v208 = vpop.f32.mrf.mxu0
    %v209 = vadd.f32 %v165, %v208
    %210 = vdwg.mxu0
    %211 = vmatpush.msra.mxu0 0.0
    %212 = vmatpush.msra.mxu0 0.0
    %213 = vmatpush.msra.mxu0 0.0
    %214 = vmatpush.msra.mxu0 0.0
    %215 = vmatpush.msra.mxu0 0.0
    %216 = vmatpush.msra.mxu0 0.0
    %217 = vmatpush.msra.mxu0 0.0
    %218 = vmatpush.msra.mxu0 0.0
    %219 = vmatpush.msra.mxu0 0.0
    %220 = vmatpush.msra.mxu0 0.0
    %221 = vmatpush.msra.mxu0 0.0
    %222 = vmatpush.msra.mxu0 0.0
    %223 = vmatpush.msra.mxu0 0.0
    %224 = vmatpush.msra.mxu0 0.0
    %225 = vmatpush.msra.mxu0 0.0
    %226 = vmatpush.msra.mxu0 %v137
    %227 = vmatmul.f32.gmra.mxu0 %v189
    %v228 = vpop.f32.mrf.mxu0
    %v229 = vadd.f32 %v185, %v228
    %230 = vdwg.mxu0
    %v231 = vld [vmem:[#allocation7] sm:$0x3]
    %v232 = vld [vmem:[#allocation11] sm:$0xff]
    %v233 = vld [vmem:[#allocation11 + $0x8] sm:$0xff]
    %v235 = vsel %vm187, %v231, 0
    %237 = vmatpush.msra.mxu0 0.0
    %238 = vmatpush.msra.mxu0 0.0
    %239 = vmatpush.msra.mxu0 0.0
    %240 = vmatpush.msra.mxu0 0.0
    %241 = vmatpush.msra.mxu0 0.0
    %242 = vmatpush.msra.mxu0 0.0
    %243 = vmatpush.msra.mxu0 0.0
    %244 = vmatpush.msra.mxu0 0.0
    %245 = vmatpush.msra.mxu0 0.0
    %246 = vmatpush.msra.mxu0 0.0
    %247 = vmatpush.msra.mxu0 0.0
    %248 = vmatpush.msra.mxu0 0.0
    %249 = vmatpush.msra.mxu0 0.0
    %250 = vmatpush.msra.mxu0 0.0
    %251 = vmatpush.msra.mxu0 0.0
    %252 = vmatpush.msra.mxu0 %v232
    %253 = vmatmul.f32.gmra.mxu0 %v235
    %v254 = vpop.f32.mrf.mxu0
    %v255 = vadd.f32 0.0, %v254
    %256 = vdwg.mxu0
    %257 = vmatpush.msra.mxu0 0.0
    %258 = vmatpush.msra.mxu0 0.0
    %259 = vmatpush.msra.mxu0 0.0
    %260 = vmatpush.msra.mxu0 0.0
    %261 = vmatpush.msra.mxu0 0.0
    %262 = vmatpush.msra.mxu0 0.0
    %263 = vmatpush.msra.mxu0 0.0
    %264 = vmatpush.msra.mxu0 0.0
    %265 = vmatpush.msra.mxu0 0.0
    %266 = vmatpush.msra.mxu0 0.0
    %267 = vmatpush.msra.mxu0 0.0
    %268 = vmatpush.msra.mxu0 0.0
    %269 = vmatpush.msra.mxu0 0.0
    %270 = vmatpush.msra.mxu0 0.0
    %271 = vmatpush.msra.mxu0 0.0
    %272 = vmatpush.msra.mxu0 %v233
    %273 = vmatmul.f32.gmra.mxu0 %v235
    %v274 = vpop.f32.mrf.mxu0
    %v275 = vadd.f32 0.0, %v274
    %276 = vdwg.mxu0
    %v277 = vadd.f32 %v209, %v255
    %v278 = vadd.f32 %v229, %v275
    %v279 = vld [vmem:[%s6] sm:$0x3]
    %v281 = vperm.slane %v279, 0
    %v282 = vperm.slane %v279, 1
    %v285 = vadd.f32 %v277, %v281
    %v286 = vadd.f32 %v278, %v282
    %287 = vrot.lane.b32.xlu0 %v285, 32
    %v288 = vpop.permute.xlu0 %287
    %v289 = vmax.f32 %v285, %v288
    %290 = vrot.lane.b32.xlu0 %v289, 64
    %v291 = vpop.permute.xlu0 %290
    %v292 = vmax.f32 %v289, %v291
    %v293 = vsub.f32 %v285, %v292
    %v294 = vmul.f32 %v293, 1.442695
    %v295 = vpow.pop %v294
    %296 = vrot.lane.b32.xlu0 %v295, 32
    %v297 = vpop.permute.xlu0 %296
    %v298 = vadd.f32 %v295, %v297
    %299 = vrot.lane.b32.xlu0 %v298, 64
    %v300 = vpop.permute.xlu0 %299
    %v301 = vadd.f32 %v298, %v300
    %v302 = vrcp.pop %v301
    %v303 = vmul.f32 %v301, %v302
    %v304 = vsub.f32 2.0, %v303
    %v305 = vmul.f32 %v302, %v304
    %v306 = vmul.f32 %v295, %v305
    %v307 = vmul.f32 %v306, %v286
    %308 = vst [vmem:[#allocation14] sm:$0x3] %v307
    %v309 = vld [vmem:[#allocation13] sm:$0xff]
    %v310 = vld [vmem:[#allocation13 + $0x8] sm:$0xff]
    %v311 = vld [vmem:[#allocation13 + $0x10] sm:$0xff]
    %v312 = vld [vmem:[#allocation13 + $0x18] sm:$0xff]
    %v313 = vld [vmem:[#allocation13 + $0x20] sm:$0xff]
    %v314 = vld [vmem:[#allocation13 + $0x28] sm:$0xff]
    %v315 = vld [vmem:[#allocation13 + $0x30] sm:$0xff]
    %v316 = vld [vmem:[#allocation13 + $0x38] sm:$0xff]
    %v317 = vld [vmem:[#allocation13 + $0x40] sm:$0xff]
    %v318 = vld [vmem:[#allocation13 + $0x48] sm:$0xff]
    %v319 = vld [vmem:[#allocation13 + $0x50] sm:$0xff]
    %v320 = vld [vmem:[#allocation13 + $0x58] sm:$0xff]
    %v321 = vld [vmem:[#allocation13 + $0x60] sm:$0xff]
    %v322 = vld [vmem:[#allocation13 + $0x68] sm:$0xff]
    %v323 = vld [vmem:[#allocation13 + $0x70] sm:$0xff]
    %v324 = vld [vmem:[#allocation13 + $0x78] sm:$0xff]
    %v325 = vld [vmem:[%s8] sm:$0x1]
    %v327 = vperm.slane %v325, 0
    %329 = vmatpush.msra.mxu0 %v324
    %330 = vmatpush.msra.mxu0 %v323
    %331 = vmatpush.msra.mxu0 %v322
    %332 = vmatpush.msra.mxu0 %v321
    %333 = vmatpush.msra.mxu0 %v320
    %334 = vmatpush.msra.mxu0 %v319
    %335 = vmatpush.msra.mxu0 %v318
    %336 = vmatpush.msra.mxu0 %v317
    %337 = vmatpush.msra.mxu0 %v316
    %338 = vmatpush.msra.mxu0 %v315
    %339 = vmatpush.msra.mxu0 %v314
    %340 = vmatpush.msra.mxu0 %v313
    %341 = vmatpush.msra.mxu0 %v312
    %342 = vmatpush.msra.mxu0 %v311
    %343 = vmatpush.msra.mxu0 %v310
    %344 = vmatpush.msra.mxu0 %v309
    %345 = vmatmul.f32.gmra.mxu0 %v307
    %v346 = vpop.f32.mrf.mxu0
    %v347 = vadd.f32 %v327, %v346
    %348 = vdwg.mxu0
    %349 = vst [vmem:[#allocation15] sm:$0x3] %v347
    // Predicated region
    $region66: #{tpu_custom_call.1} parent=1 // pred_check
      _
    $region67: #{tpu_custom_call.1} parent=1 // pred_check_branch
      %351 = sbr.rel (0) target = $region69
    $region68: #{tpu_custom_call.1} parent=1 // pred_region
      %353 = vsyncadd [#allocation4], 0
      %s355 = sshll.u32 [#allocation14], 4
      %s356 = int_to_ptr.vmem [resolvable:$true] %s355
      %s357 = sshll.u32 %s9, 4
      %s358 = int_to_ptr.hbm [resolvable:$true] %s357
      %360 = dma.vmem_to_hbm [thread:$0]  %s356, 32, %s358, [#allocation4]
    $region69: #{tpu_custom_call.1} parent=1 // pred_fallthru
      _
    // Predicated region
    $region70: #{tpu_custom_call.1} parent=1 // pred_check
      _
    $region71: #{tpu_custom_call.1} parent=1 // pred_check_branch
      %362 = sbr.rel (0) target = $region73
    $region72: #{tpu_custom_call.1} parent=1 // pred_region
      %364 = vsyncadd [#allocation16], 0
      %s366 = sshll.u32 [#allocation15], 4
      %s367 = int_to_ptr.vmem [resolvable:$true] %s366
      %s368 = sshll.u32 %s10, 4
      %s369 = int_to_ptr.hbm [resolvable:$true] %s368
      %371 = dma.vmem_to_hbm [thread:$0]  %s367, 32, %s369, [#allocation16]
    $region73: #{tpu_custom_call.1} parent=1 // pred_fallthru
      _
    // Predicated region
    $region74: #{tpu_custom_call.1} parent=1 // pred_check
      _
    $region75: #{tpu_custom_call.1} parent=1 // pred_check_branch
      %373 = sbr.rel (0) target = $region77
    $region76: #{tpu_custom_call.1} parent=1 // pred_region
      %375 = dma.done [#allocation4], 32
    $region77: #{tpu_custom_call.1} parent=1 // pred_fallthru
      _
    // Predicated region
    $region78: #{tpu_custom_call.1} parent=1 // pred_check
      _
    $region79: #{tpu_custom_call.1} parent=1 // pred_check_branch
      %377 = sbr.rel (0) target = $region81
    $region80: #{tpu_custom_call.1} parent=1 // pred_region
      %379 = dma.done [#allocation16], 32
    $region81: #{tpu_custom_call.1} parent=1 // pred_fallthru
      _
    %380 = vsyncpa [#allocation3], 1
    %381 = vsyncpa [#allocation6], 1
    %382 = vsyncpa [#allocation9], 1
    %383 = vsyncpa [#allocation12], 1
    %384 = vsyncpa [#allocation4], 1
    %385 = vsyncpa [#allocation16], 1

</llo_original>
